<compile_context>
chip_gen: v7x
topology: tpu7x:2x2x1
jax: 0.10.0
libtpu: 0.0.40
codegen_flags: <defaults>
</compile_context>

<pallas_src>
import functools

import jax
import jax.numpy as jnp
import numpy as np
from jax import lax
from jax.experimental import pallas as pl
from jax.experimental.pallas import tpu as pltpu

_MIB = 1024 * 1024


def _round_up(x: int, m: int) -> int:
    return (x + m - 1) // m * m


def _vmem_budget_bytes() -> int:
    """Physical VMEM minus headroom: ~56 MiB on v7x, ~112 MiB on v5e/v6e."""
    try:
        cap = int(pltpu.get_tpu_info().vmem_capacity_bytes)
    except Exception:  # conservative fallback (v7x-sized)
        cap = 64 * _MIB
    return (cap * 7) // 8


# --------------------------------------------------------------------------- #
# Path 1: whole-graph-resident kernel (A, E live entirely in VMEM).           #
# --------------------------------------------------------------------------- #
def _lightgcn_resident_kernel(a_ref, e0_ref, out_ref, *, n_layers: int, unroll: bool):
    """All propagation layers in one invocation; A and E0 whole-array in VMEM."""
    a = a_ref[...]
    e0 = e0_ref[...].astype(jnp.float32)

    def body(_, carry):
        e, acc = carry
        # MXU matmul; operands may be bf16 (if A is bf16), accumulation stays f32.
        e_next = jnp.dot(a, e.astype(a.dtype), preferred_element_type=jnp.float32)
        return e_next, acc + e_next

    _, acc = lax.fori_loop(0, n_layers, body, (e0, e0), unroll=unroll)

    inv = jnp.float32(1.0 / (n_layers + 1))  # compile-time constant
    out_ref[...] = (acc * inv).astype(out_ref.dtype)


# --------------------------------------------------------------------------- #
# Path 2: tiled, pipelined per-layer matmul (A streamed from HBM).             #
# --------------------------------------------------------------------------- #
def _matmul_tile_kernel(a_ref, e_ref, o_ref, acc_ref):
    @pl.when(pl.program_id(1) == 0)
    def _():
        acc_ref[...] = jnp.zeros_like(acc_ref)

    acc_ref[...] += jnp.dot(
        a_ref[...], e_ref[...].astype(a_ref.dtype), preferred_element_type=jnp.float32
    )

    @pl.when(pl.program_id(1) == pl.num_programs(1) - 1)
    def _():
        o_ref[...] = acc_ref[...].astype(o_ref.dtype)


def _tiled_matmul(a: jax.Array, e: jax.Array, *, tm: int, tk: int,
                  vmem_budget: int) -> jax.Array:
    """One propagation layer A @ E with row tiles 'parallel' (uses both v7x TCs)."""
    Np, _ = a.shape
    _, Dp = e.shape
    b_a = int(np.dtype(a.dtype).itemsize)
    b_e = int(np.dtype(e.dtype).itemsize)

    # A: triple-buffered tiles; E / out: double-buffered; + f32 accumulator + margin.
    needed = (3 * tm * tk * b_a + 2 * tk * Dp * b_e + 2 * tm * Dp * b_e
              + tm * Dp * 4 + 4 * _MIB)
    vmem_limit = min(vmem_budget, max(needed, 32 * _MIB))

    flops = 2 * Np * Np * Dp
    bytes_accessed = Np * Np * b_a + 2 * Np * Dp * b_e

    return pl.pallas_call(
        _matmul_tile_kernel,
        out_shape=jax.ShapeDtypeStruct((Np, Dp), e.dtype),
        grid_spec=pltpu.PrefetchScalarGridSpec(
            num_scalar_prefetch=0,
            grid=(Np // tm, Np // tk),
            in_specs=[
                # A streamed from HBM with deep (3-buffer) pipelining.
                pl.BlockSpec((tm, tk), lambda i, k: (i, k),
                             pipeline_mode=pl.Buffered(3)),
                pl.BlockSpec((tk, Dp), lambda i, k: (k, 0)),
            ],
            out_specs=pl.BlockSpec((tm, Dp), lambda i, k: (i, 0)),
            scratch_shapes=[pltpu.VMEM((tm, Dp), jnp.float32)],
        ),
        compiler_params=pltpu.CompilerParams(
            dimension_semantics=("parallel", "arbitrary"),
            vmem_limit_bytes=vmem_limit,
        ),
        cost_estimate=pl.CostEstimate(
            flops=flops, transcendentals=0, bytes_accessed=bytes_accessed
        ),
    )(a, e)


# --------------------------------------------------------------------------- #
# Dispatcher                                                                    #
# --------------------------------------------------------------------------- #
def lightgcn_propagate(adj: jax.Array, e0: jax.Array, n_layers: int, *,
                       matmul_dtype=jnp.float32, force_tiled: bool = False,
                       tile: int = 256) -> jax.Array:
    """n_layers of LightGCN propagation + layer-mean via Pallas kernels."""
    if n_layers == 0:
        return e0
    N, D = e0.shape
    assert adj.shape == (N, N)

    b_a = int(np.dtype(matmul_dtype).itemsize)
    b_e = int(np.dtype(e0.dtype).itemsize)
    budget = _vmem_budget_bytes()

    # Padding: node dim -> multiple of 128 (lane-dense A, dense K tiles for the MXU),
    # feature dim -> multiple of 128 (lane-dense stores). Zero padding is exact.
    Dp = _round_up(D, 128)
    Np_r = _round_up(N, 128)

    # Resident-path footprint: A + E0 + out + two f32 (Np,Dp) loop carries + margin.
    resident_bytes = (Np_r * Np_r * b_a
                      + 2 * Np_r * Dp * b_e
                      + 2 * Np_r * Dp * 4
                      + 4 * _MIB)
    use_resident = (not force_tiled) and resident_bytes <= budget

    if use_resident:
        adj_p = jnp.zeros((Np_r, Np_r), matmul_dtype).at[:N, :N].set(
            adj.astype(matmul_dtype))
        e0_p = jnp.zeros((Np_r, Dp), e0.dtype).at[:N, :D].set(e0)

        flops = 2 * Np_r * Np_r * Dp * n_layers
        bytes_accessed = Np_r * Np_r * b_a + 2 * Np_r * Dp * b_e

        out = pl.pallas_call(
            functools.partial(_lightgcn_resident_kernel, n_layers=n_layers,
                              unroll=(n_layers <= 4)),
            out_shape=jax.ShapeDtypeStruct((Np_r, Dp), e0.dtype),
            in_specs=[
                pl.BlockSpec(memory_space=pltpu.MemorySpace.VMEM),  # A, resident
                pl.BlockSpec(memory_space=pltpu.MemorySpace.VMEM),  # E0
            ],
            out_specs=pl.BlockSpec(memory_space=pltpu.MemorySpace.VMEM),
            compiler_params=pltpu.CompilerParams(
                # Sized from actual buffers, capped at 7/8 of physical VMEM.
                vmem_limit_bytes=min(budget, max(resident_bytes, 32 * _MIB)),
            ),
            cost_estimate=pl.CostEstimate(
                flops=flops, transcendentals=0, bytes_accessed=bytes_accessed
            ),
        )(adj_p, e0_p)
        return out[:N, :D]

    # ----- Tiled fallback: per-layer pipelined matmul, rows split across TCs ------
    tm = tk = tile
    Np_t = _round_up(N, max(tm, 128))
    adj_p = jnp.zeros((Np_t, Np_t), matmul_dtype).at[:N, :N].set(adj.astype(matmul_dtype))
    e = jnp.zeros((Np_t, Dp), jnp.float32).at[:N, :D].set(e0.astype(jnp.float32))
    acc = e
    for _ in range(n_layers):
        e = _tiled_matmul(adj_p, e, tm=tm, tk=tk, vmem_budget=budget)
        acc = acc + e
    out = acc * jnp.float32(1.0 / (n_layers + 1))
    return out[:N, :D].astype(e0.dtype)


# --------------------------------------------------------------------------- #
# Adjacency construction + module-level forward                                #
# --------------------------------------------------------------------------- #
def build_adj_matrix(u_id, v_id, users_num, items_num):
    """Dense equivalent of the sparse adjacency built inside LightGCNLayer.forward."""
    n = users_num + items_num
    u_deg = jnp.zeros((users_num,), jnp.float32).at[u_id].add(1.0) + 1.0
    v_deg = jnp.zeros((items_num,), jnp.float32).at[v_id].add(1.0) + 1.0

    adj = jnp.zeros((n, n), jnp.float32)
    adj = adj.at[u_id, v_id].add(1.0 / u_deg[u_id])
    adj = adj.at[v_id, u_id].add(1.0 / v_deg[v_id])
    diag = jnp.concatenate([1.0 / u_deg, 1.0 / v_deg])
    adj = adj.at[jnp.arange(n), jnp.arange(n)].add(diag)
    return adj


def lightgcn_forward(u_id, v_id, user_embedding, item_embedding, n_layers, *,
                     matmul_dtype=jnp.float32, adj=None, force_tiled=False, tile=256):
    users_num = user_embedding.shape[0]
    items_num = item_embedding.shape[0]
    if adj is None:  # can be precomputed / cached by the caller for static graphs
        adj = build_adj_matrix(u_id, v_id, users_num, items_num)
    all_emb = jnp.concatenate([user_embedding, item_embedding], axis=0)
    light_out = lightgcn_propagate(adj, all_emb, n_layers, matmul_dtype=matmul_dtype,
                                   force_tiled=force_tiled, tile=tile)
    return light_out[:users_num], light_out[users_num:]


def lightgcn_forward_ref(u_id, v_id, user_embedding, item_embedding, n_layers):
    """Plain-JAX reference matching the PyTorch forward (eval mode)."""
    users_num = user_embedding.shape[0]
    adj = build_adj_matrix(u_id, v_id, users_num, item_embedding.shape[0])
    e = jnp.concatenate([user_embedding, item_embedding], axis=0)
    embs = [e]
    for _ in range(n_layers):
        e = jnp.dot(adj, e, preferred_element_type=jnp.float32)
        embs.append(e)
    light_out = jnp.mean(jnp.stack(embs, axis=1), axis=1)
    return light_out[:users_num], light_out[users_num:]


if __name__ == "__main__":
    key = jax.random.PRNGKey(0)
    (k_u, k_v, k_ue, k_ie,
     k_u2, k_v2, k_ue2, k_ie2) = jax.random.split(key, 8)

    # --- small problem: resident (whole-in-VMEM) path, f32 ---------------------
    users_num, items_num, hidden, n_edges, n_layers = 24, 40, 32, 96, 3

    u_id = jax.random.randint(k_u, (n_edges,), 0, users_num, dtype=jnp.int32)
    v_id = jax.random.randint(k_v, (n_edges,), 0, items_num, dtype=jnp.int32)
    user_embedding = jax.random.normal(k_ue, (users_num, hidden), jnp.float32)
    item_embedding = jax.random.normal(k_ie, (items_num, hidden), jnp.float32)

    users_out, items_out = lightgcn_forward(
        u_id, v_id, user_embedding, item_embedding, n_layers)
    jax.block_until_ready((users_out, items_out))

    users_ref, items_ref = lightgcn_forward_ref(
        u_id, v_id, user_embedding, item_embedding, n_layers)
    np.testing.assert_allclose(np.asarray(users_out), np.asarray(users_ref),
                               rtol=1e-4, atol=1e-4)
    np.testing.assert_allclose(np.asarray(items_out), np.asarray(items_ref),
                               rtol=1e-4, atol=1e-4)
    assert users_out.shape == (users_num, hidden)
    assert items_out.shape == (items_num, hidden)

    # --- bf16 MXU operands (f32 accumulation): loose sanity tolerance ----------
    users_bf, items_bf = lightgcn_forward(
        u_id, v_id, user_embedding, item_embedding, n_layers,
        matmul_dtype=jnp.bfloat16)
    jax.block_until_ready((users_bf, items_bf))
    np.testing.assert_allclose(np.asarray(users_bf), np.asarray(users_ref),
                               rtol=1e-1, atol=1e-1)
    np.testing.assert_allclose(np.asarray(items_bf), np.asarray(items_ref),
                               rtol=1e-1, atol=1e-1)

    # --- tiled / pipelined fallback path (forced) on a slightly larger graph ---
    users2, items2, n_edges2, n_layers2 = 150, 170, 800, 2
    u2 = jax.random.randint(k_u2, (n_edges2,), 0, users2, dtype=jnp.int32)
    v2 = jax.random.randint(k_v2, (n_edges2,), 0, items2, dtype=jnp.int32)
    ue2 = jax.random.normal(k_ue2, (users2, hidden), jnp.float32)
    ie2 = jax.random.normal(k_ie2, (items2, hidden), jnp.float32)

    u_t, i_t = lightgcn_forward(u2, v2, ue2, ie2, n_layers2,
                                force_tiled=True, tile=128)
    jax.block_until_ready((u_t, i_t))
    u_r, i_r = lightgcn_forward_ref(u2, v2, ue2, ie2, n_layers2)
    np.testing.assert_allclose(np.asarray(u_t), np.asarray(u_r), rtol=1e-2, atol=1e-2)
    np.testing.assert_allclose(np.asarray(i_t), np.asarray(i_r), rtol=1e-2, atol=1e-2)

    print("KERNEL_OK")
</pallas_src>

<mosaic_0001>
module attributes {stable_mosaic.version = 11 : i64} {
  func.func @_lightgcn_resident_kernel(%arg0: memref<128x128xf32, #tpu.memory_space<vmem>>, %arg1: memref<128x128xf32, #tpu.memory_space<vmem>>, %arg2: memref<128x128xf32, #tpu.memory_space<vmem>>) attributes {dimension_semantics = [], scalar_prefetch = 0 : i64, scratch_operands = 0 : i64, tpu.core_type = #tpu.core_type<tc>} {
    %c0 = arith.constant 0 : index
    %c0_0 = arith.constant 0 : index
    %0 = vector.load %arg0[%c0, %c0_0] : memref<128x128xf32, #tpu.memory_space<vmem>>, vector<128x128xf32>
    %c0_1 = arith.constant 0 : index
    %c0_2 = arith.constant 0 : index
    %1 = vector.load %arg1[%c0_1, %c0_2] : memref<128x128xf32, #tpu.memory_space<vmem>>, vector<128x128xf32>
    %c0_i32 = arith.constant 0 : i32
    %cst = arith.constant dense<0.000000e+00> : vector<128x128xf32>
    %2 = tpu.matmul %0, %1, %cst {dimension_numbers = #tpu.dot_dimension_numbers<[1], [0], [0], [1], [0, 0, 1, 1], [], []>} : vector<128x128xf32>, vector<128x128xf32>, vector<128x128xf32> -> vector<128x128xf32>
    %3 = arith.addf %1, %2 : vector<128x128xf32>
    %c1_i32 = arith.constant 1 : i32
    %cst_3 = arith.constant dense<0.000000e+00> : vector<128x128xf32>
    %4 = tpu.matmul %0, %2, %cst_3 {dimension_numbers = #tpu.dot_dimension_numbers<[1], [0], [0], [1], [0, 0, 1, 1], [], []>} : vector<128x128xf32>, vector<128x128xf32>, vector<128x128xf32> -> vector<128x128xf32>
    %5 = arith.addf %3, %4 : vector<128x128xf32>
    %c2_i32 = arith.constant 2 : i32
    %cst_4 = arith.constant dense<0.000000e+00> : vector<128x128xf32>
    %6 = tpu.matmul %0, %4, %cst_4 {dimension_numbers = #tpu.dot_dimension_numbers<[1], [0], [0], [1], [0, 0, 1, 1], [], []>} : vector<128x128xf32>, vector<128x128xf32>, vector<128x128xf32> -> vector<128x128xf32>
    %7 = arith.addf %5, %6 : vector<128x128xf32>
    %cst_5 = arith.constant 2.500000e-01 : f32
    %8 = vector.broadcast %cst_5 : f32 to vector<128x128xf32>
    %9 = arith.mulf %7, %8 : vector<128x128xf32>
    %c0_6 = arith.constant 0 : index
    %c0_7 = arith.constant 0 : index
    %10 = vector.load %arg2[%c0_6, %c0_7] : memref<128x128xf32, #tpu.memory_space<vmem>>, vector<128x128xf32>
    tpu.vector_store %arg2[%c0_6, %c0_7], %9 {strides = array<i32>} : memref<128x128xf32, #tpu.memory_space<vmem>>, vector<128x128xf32>,
    return
  }
}

</mosaic_0001>

<llo_original>
// kernel: tpu_custom_call.1
$region0: #{tpu_custom_call.1}
  #allocation0 [shape = 'u32[]', space=smem, size = 0x4, offset = 0x4, fixed_abs, tag = 'smem constant byte address 0x4 - core index']
  #allocation1 [shape = 'u32[144,128]{1,0:T(1,128)}', space=vmem, size = 0x12000, scoped, tag = 'internal scratch']
  %s0 = inlined_call_operand.hbm [shape: f32[128,128], index: 0, kind: input, shape index: {}]
  %s1 = inlined_call_operand.hbm [shape: f32[128,128], index: 1, kind: input, shape index: {}]
  %s2 = inlined_call_operand.hbm [shape: f32[128,128], index: 2, kind: output, shape index: {}]
  %s3 = sld [smem:[#allocation0]]
  $region26: #{tpu_custom_call.1} parent=0
    _
  %s5 = ssub.s32 1, %s3
  %s6 = scalar_select 0, %s5, %s3
  $region1: #{tpu_custom_call.1} parent=0
    #allocation2 [shape = 'u8[65536]{0}', space=vmem, size = 0x10000, scoped, tag = 'input window, operand 0, single buffered']
    #allocation3 [shape = 's32[1]{0}', space=sflag, size = 0x4, scoped, tag = 'scoped memory for tpu_custom_call.1']
    #allocation4 [shape = 's32[1]{0}', space=sflag, size = 0x4, scoped, tag = 'scoped memory for tpu_custom_call.1']
    #allocation5 [shape = 'u8[65536]{0}', space=vmem, size = 0x10000, scoped, tag = 'input window, operand 1, single buffered']
    #allocation6 [shape = 's32[1]{0}', space=sflag, size = 0x4, scoped, tag = 'scoped memory for tpu_custom_call.1']
    #allocation7 [shape = 'u8[65536]{0}', space=vmem, size = 0x10000, scoped, tag = 'output window, operand 0, single buffered']
    %7 = vsyncpa [#allocation3], 0
    %8 = vsyncpa [#allocation6], 0
    %9 = vsyncpa [#allocation4], 0
    // Predicated region
    $region2: #{tpu_custom_call.1} parent=1 // pred_check
      _
    $region3: #{tpu_custom_call.1} parent=1 // pred_check_branch
      %11 = sbr.rel (0) target = $region5
    $region4: #{tpu_custom_call.1} parent=1 // pred_region
      %s13 = ssub.s32 2048, 2048
      %14 = vsyncadd [#allocation3], %s13
      %s15 = sshll.u32 [#allocation2], 4
      %s16 = int_to_ptr.vmem [resolvable:$true] %s15
      %21 = dma.hbm_to_vmem [thread:$0]  %s0, 2048, %s16, [#allocation3], 128, 128, 8
    $region5: #{tpu_custom_call.1} parent=1 // pred_fallthru
      _
    // Predicated region
    $region6: #{tpu_custom_call.1} parent=1 // pred_check
      _
    $region7: #{tpu_custom_call.1} parent=1 // pred_check_branch
      %23 = sbr.rel (0) target = $region9
    $region8: #{tpu_custom_call.1} parent=1 // pred_region
      %s25 = ssub.s32 2048, 2048
      %26 = vsyncadd [#allocation6], %s25
      %s27 = sshll.u32 [#allocation5], 4
      %s28 = int_to_ptr.vmem [resolvable:$true] %s27
      %33 = dma.hbm_to_vmem [thread:$0]  %s1, 2048, %s28, [#allocation6], 128, 128, 8
    $region9: #{tpu_custom_call.1} parent=1 // pred_fallthru
      _
    // Predicated region
    $region10: #{tpu_custom_call.1} parent=1 // pred_check
      _
    $region11: #{tpu_custom_call.1} parent=1 // pred_check_branch
      %35 = sbr.rel (0) target = $region13
    $region12: #{tpu_custom_call.1} parent=1 // pred_region
      %36 = dma.done [#allocation3], 2048
    $region13: #{tpu_custom_call.1} parent=1 // pred_fallthru
      _
    // Predicated region
    $region14: #{tpu_custom_call.1} parent=1 // pred_check
      _
    $region15: #{tpu_custom_call.1} parent=1 // pred_check_branch
      %38 = sbr.rel (0) target = $region17
    $region16: #{tpu_custom_call.1} parent=1 // pred_region
      %39 = dma.done [#allocation6], 2048
    $region17: #{tpu_custom_call.1} parent=1 // pred_fallthru
      _
    %v40 = vld [vmem:[#allocation2] sm:$0xff]
    %v41 = vld [vmem:[#allocation2 + $0x8] sm:$0xff]
    %v42 = vld [vmem:[#allocation2 + $0x10] sm:$0xff]
    %v43 = vld [vmem:[#allocation2 + $0x18] sm:$0xff]
    %v44 = vld [vmem:[#allocation2 + $0x20] sm:$0xff]
    %v45 = vld [vmem:[#allocation2 + $0x28] sm:$0xff]
    %v46 = vld [vmem:[#allocation2 + $0x30] sm:$0xff]
    %v47 = vld [vmem:[#allocation2 + $0x38] sm:$0xff]
    %v48 = vld [vmem:[#allocation2 + $0x40] sm:$0xff]
    %v49 = vld [vmem:[#allocation2 + $0x48] sm:$0xff]
    %v50 = vld [vmem:[#allocation2 + $0x50] sm:$0xff]
    %v51 = vld [vmem:[#allocation2 + $0x58] sm:$0xff]
    %v52 = vld [vmem:[#allocation2 + $0x60] sm:$0xff]
    %v53 = vld [vmem:[#allocation2 + $0x68] sm:$0xff]
    %v54 = vld [vmem:[#allocation2 + $0x70] sm:$0xff]
    %v55 = vld [vmem:[#allocation2 + $0x78] sm:$0xff]
    %v56 = vld [vmem:[#allocation5] sm:$0xff]
    %v57 = vld [vmem:[#allocation5 + $0x8] sm:$0xff]
    %v58 = vld [vmem:[#allocation5 + $0x10] sm:$0xff]
    %v59 = vld [vmem:[#allocation5 + $0x18] sm:$0xff]
    %v60 = vld [vmem:[#allocation5 + $0x20] sm:$0xff]
    %v61 = vld [vmem:[#allocation5 + $0x28] sm:$0xff]
    %v62 = vld [vmem:[#allocation5 + $0x30] sm:$0xff]
    %v63 = vld [vmem:[#allocation5 + $0x38] sm:$0xff]
    %v64 = vld [vmem:[#allocation5 + $0x40] sm:$0xff]
    %v65 = vld [vmem:[#allocation5 + $0x48] sm:$0xff]
    %v66 = vld [vmem:[#allocation5 + $0x50] sm:$0xff]
    %v67 = vld [vmem:[#allocation5 + $0x58] sm:$0xff]
    %v68 = vld [vmem:[#allocation5 + $0x60] sm:$0xff]
    %v69 = vld [vmem:[#allocation5 + $0x68] sm:$0xff]
    %v70 = vld [vmem:[#allocation5 + $0x70] sm:$0xff]
    %v71 = vld [vmem:[#allocation5 + $0x78] sm:$0xff]
    %72 = vmatprep.subr.mxu0 0.0
    %73 = vmatpush1.msra.mxu0 %v56
    %74 = vmatprep.subr.mxu0 0.0
    %75 = vmatpush1.msra.mxu0 %v57
    %76 = vmatprep.subr.mxu0 0.0
    %77 = vmatpush1.msra.mxu0 %v58
    %78 = vmatprep.subr.mxu0 0.0
    %79 = vmatpush1.msra.mxu0 %v59
    %80 = vmatprep.subr.mxu0 0.0
    %81 = vmatpush1.msra.mxu0 %v60
    %82 = vmatprep.subr.mxu0 0.0
    %83 = vmatpush1.msra.mxu0 %v61
    %84 = vmatprep.subr.mxu0 0.0
    %85 = vmatpush1.msra.mxu0 %v62
    %86 = vmatprep.subr.mxu0 0.0
    %87 = vmatpush1.msra.mxu0 %v63
    %88 = vmatprep.subr.mxu0 0.0
    %89 = vmatpush1.msra.mxu0 %v64
    %90 = vmatprep.subr.mxu0 0.0
    %91 = vmatpush1.msra.mxu0 %v65
    %92 = vmatprep.subr.mxu0 0.0
    %93 = vmatpush1.msra.mxu0 %v66
    %94 = vmatprep.subr.mxu0 0.0
    %95 = vmatpush1.msra.mxu0 %v67
    %96 = vmatprep.subr.mxu0 0.0
    %97 = vmatpush1.msra.mxu0 %v68
    %98 = vmatprep.subr.mxu0 0.0
    %99 = vmatpush1.msra.mxu0 %v69
    %100 = vmatprep.subr.mxu0 0.0
    %101 = vmatpush1.msra.mxu0 %v70
    %102 = vmatprep.subr.mxu0 0.0
    %103 = vmatpush1.msra.mxu0 %v71
    %104 = vmatprep.subr.mxu0 0.0
    %105 = vmatpush1.msra.mxu0 0.0
    %106 = vmatprep.subr.mxu0 0.0
    %107 = vmatpush1.msra.mxu0 0.0
    %108 = vmatprep.subr.mxu0 0.0
    %109 = vmatpush1.msra.mxu0 0.0
    %110 = vmatprep.subr.mxu0 0.0
    %111 = vmatpush1.msra.mxu0 0.0
    %112 = vmatprep.subr.mxu0 0.0
    %113 = vmatpush1.msra.mxu0 0.0
    %114 = vmatprep.subr.mxu0 0.0
    %115 = vmatpush1.msra.mxu0 0.0
    %116 = vmatprep.subr.mxu0 0.0
    %117 = vmatpush1.msra.mxu0 0.0
    %118 = vmatprep.subr.mxu0 0.0
    %119 = vmatpush1.msra.mxu0 0.0
    %120 = vmatprep.subr.mxu0 0.0
    %121 = vmatpush1.msra.mxu0 0.0
    %122 = vmatprep.subr.mxu0 0.0
    %123 = vmatpush1.msra.mxu0 0.0
    %124 = vmatprep.subr.mxu0 0.0
    %125 = vmatpush1.msra.mxu0 0.0
    %126 = vmatprep.subr.mxu0 0.0
    %127 = vmatpush1.msra.mxu0 0.0
    %128 = vmatprep.subr.mxu0 0.0
    %129 = vmatpush1.msra.mxu0 0.0
    %130 = vmatprep.subr.mxu0 0.0
    %131 = vmatpush1.msra.mxu0 0.0
    %132 = vmatprep.subr.mxu0 0.0
    %133 = vmatpush1.msra.mxu0 0.0
    %134 = vmatprep.subr.mxu0 0.0
    %135 = vmatpush1.msra.mxu0 0.0
    %136 = vmatprep.mubr.f32.mxu0 0.0
    %137 = vmatmul.mubr.f32.gmra.mrb[0].mxu0 %v40
    %v138 = vpop.f32.mrb[0].mxu0
    %v139 = vadd.f32 0.0, %v138
    %v140 = vpop.f32.mrb[0].mxu0
    %141 = vmatprep.mubr.f32.mxu0 0.0
    %142 = vmatmul.mubr.f32.gmra.mrb[0].mxu0 %v41
    %v143 = vpop.f32.mrb[0].mxu0
    %v144 = vadd.f32 0.0, %v143
    %v145 = vpop.f32.mrb[0].mxu0
    %146 = vmatprep.mubr.f32.mxu0 0.0
    %147 = vmatmul.mubr.f32.gmra.mrb[0].mxu0 %v42
    %v148 = vpop.f32.mrb[0].mxu0
    %v149 = vadd.f32 0.0, %v148
    %v150 = vpop.f32.mrb[0].mxu0
    %151 = vmatprep.mubr.f32.mxu0 0.0
    %152 = vmatmul.mubr.f32.gmra.mrb[0].mxu0 %v43
    %v153 = vpop.f32.mrb[0].mxu0
    %v154 = vadd.f32 0.0, %v153
    %v155 = vpop.f32.mrb[0].mxu0
    %156 = vmatprep.mubr.f32.mxu0 0.0
    %157 = vmatmul.mubr.f32.gmra.mrb[0].mxu0 %v44
    %v158 = vpop.f32.mrb[0].mxu0
    %v159 = vadd.f32 0.0, %v158
    %v160 = vpop.f32.mrb[0].mxu0
    %161 = vmatprep.mubr.f32.mxu0 0.0
    %162 = vmatmul.mubr.f32.gmra.mrb[0].mxu0 %v45
    %v163 = vpop.f32.mrb[0].mxu0
    %v164 = vadd.f32 0.0, %v163
    %v165 = vpop.f32.mrb[0].mxu0
    %166 = vmatprep.mubr.f32.mxu0 0.0
    %167 = vmatmul.mubr.f32.gmra.mrb[0].mxu0 %v46
    %v168 = vpop.f32.mrb[0].mxu0
    %v169 = vadd.f32 0.0, %v168
    %v170 = vpop.f32.mrb[0].mxu0
    %171 = vmatprep.mubr.f32.mxu0 0.0
    %172 = vmatmul.mubr.f32.gmra.mrb[0].mxu0 %v47
    %v173 = vpop.f32.mrb[0].mxu0
    %v174 = vadd.f32 0.0, %v173
    %v175 = vpop.f32.mrb[0].mxu0
    %176 = vmatprep.mubr.f32.mxu0 0.0
    %177 = vmatmul.mubr.f32.gmra.mrb[0].mxu0 %v48
    %v178 = vpop.f32.mrb[0].mxu0
    %v179 = vadd.f32 0.0, %v178
    %v180 = vpop.f32.mrb[0].mxu0
    %181 = vmatprep.mubr.f32.mxu0 0.0
    %182 = vmatmul.mubr.f32.gmra.mrb[0].mxu0 %v49
    %v183 = vpop.f32.mrb[0].mxu0
    %v184 = vadd.f32 0.0, %v183
    %v185 = vpop.f32.mrb[0].mxu0
    %186 = vmatprep.mubr.f32.mxu0 0.0
    %187 = vmatmul.mubr.f32.gmra.mrb[0].mxu0 %v50
    %v188 = vpop.f32.mrb[0].mxu0
    %v189 = vadd.f32 0.0, %v188
    %v190 = vpop.f32.mrb[0].mxu0
    %191 = vmatprep.mubr.f32.mxu0 0.0
    %192 = vmatmul.mubr.f32.gmra.mrb[0].mxu0 %v51
    %v193 = vpop.f32.mrb[0].mxu0
    %v194 = vadd.f32 0.0, %v193
    %v195 = vpop.f32.mrb[0].mxu0
    %196 = vmatprep.mubr.f32.mxu0 0.0
    %197 = vmatmul.mubr.f32.gmra.mrb[0].mxu0 %v52
    %v198 = vpop.f32.mrb[0].mxu0
    %v199 = vadd.f32 0.0, %v198
    %v200 = vpop.f32.mrb[0].mxu0
    %201 = vmatprep.mubr.f32.mxu0 0.0
    %202 = vmatmul.mubr.f32.gmra.mrb[0].mxu0 %v53
    %v203 = vpop.f32.mrb[0].mxu0
    %v204 = vadd.f32 0.0, %v203
    %v205 = vpop.f32.mrb[0].mxu0
    %206 = vmatprep.mubr.f32.mxu0 0.0
    %207 = vmatmul.mubr.f32.gmra.mrb[0].mxu0 %v54
    %v208 = vpop.f32.mrb[0].mxu0
    %v209 = vadd.f32 0.0, %v208
    %v210 = vpop.f32.mrb[0].mxu0
    %211 = vmatprep.mubr.f32.mxu0 0.0
    %212 = vmatmul.mubr.f32.gmra.mrb[0].mxu0 %v55
    %v213 = vpop.f32.mrb[0].mxu0
    %v214 = vadd.f32 0.0, %v213
    %v215 = vpop.f32.mrb[0].mxu0
    %216 = vdwg.mxu0
    %v217 = vadd.f32 %v56, %v139
    %v218 = vadd.f32 %v57, %v144
    %v219 = vadd.f32 %v58, %v149
    %v220 = vadd.f32 %v59, %v154
    %v221 = vadd.f32 %v60, %v159
    %v222 = vadd.f32 %v61, %v164
    %v223 = vadd.f32 %v62, %v169
    %v224 = vadd.f32 %v63, %v174
    %v225 = vadd.f32 %v64, %v179
    %v226 = vadd.f32 %v65, %v184
    %v227 = vadd.f32 %v66, %v189
    %v228 = vadd.f32 %v67, %v194
    %v229 = vadd.f32 %v68, %v199
    %v230 = vadd.f32 %v69, %v204
    %v231 = vadd.f32 %v70, %v209
    %v232 = vadd.f32 %v71, %v214
    %233 = vmatprep.subr.mxu0 0.0
    %234 = vmatpush1.msra.mxu0 %v139
    %235 = vmatprep.subr.mxu0 0.0
    %236 = vmatpush1.msra.mxu0 %v144
    %237 = vmatprep.subr.mxu0 0.0
    %238 = vmatpush1.msra.mxu0 %v149
    %239 = vmatprep.subr.mxu0 0.0
    %240 = vmatpush1.msra.mxu0 %v154
    %241 = vmatprep.subr.mxu0 0.0
    %242 = vmatpush1.msra.mxu0 %v159
    %243 = vmatprep.subr.mxu0 0.0
    %244 = vmatpush1.msra.mxu0 %v164
    %245 = vmatprep.subr.mxu0 0.0
    %246 = vmatpush1.msra.mxu0 %v169
    %247 = vmatprep.subr.mxu0 0.0
    %248 = vmatpush1.msra.mxu0 %v174
    %249 = vmatprep.subr.mxu0 0.0
    %250 = vmatpush1.msra.mxu0 %v179
    %251 = vmatprep.subr.mxu0 0.0
    %252 = vmatpush1.msra.mxu0 %v184
    %253 = vmatprep.subr.mxu0 0.0
    %254 = vmatpush1.msra.mxu0 %v189
    %255 = vmatprep.subr.mxu0 0.0
    %256 = vmatpush1.msra.mxu0 %v194
    %257 = vmatprep.subr.mxu0 0.0
    %258 = vmatpush1.msra.mxu0 %v199
    %259 = vmatprep.subr.mxu0 0.0
    %260 = vmatpush1.msra.mxu0 %v204
    %261 = vmatprep.subr.mxu0 0.0
    %262 = vmatpush1.msra.mxu0 %v209
    %263 = vmatprep.subr.mxu0 0.0
    %264 = vmatpush1.msra.mxu0 %v214
    %265 = vmatprep.subr.mxu0 0.0
    %266 = vmatpush1.msra.mxu0 0.0
    %267 = vmatprep.subr.mxu0 0.0
    %268 = vmatpush1.msra.mxu0 0.0
    %269 = vmatprep.subr.mxu0 0.0
    %270 = vmatpush1.msra.mxu0 0.0
    %271 = vmatprep.subr.mxu0 0.0
    %272 = vmatpush1.msra.mxu0 0.0
    %273 = vmatprep.subr.mxu0 0.0
    %274 = vmatpush1.msra.mxu0 0.0
    %275 = vmatprep.subr.mxu0 0.0
    %276 = vmatpush1.msra.mxu0 0.0
    %277 = vmatprep.subr.mxu0 0.0
    %278 = vmatpush1.msra.mxu0 0.0
    %279 = vmatprep.subr.mxu0 0.0
    %280 = vmatpush1.msra.mxu0 0.0
    %281 = vmatprep.subr.mxu0 0.0
    %282 = vmatpush1.msra.mxu0 0.0
    %283 = vmatprep.subr.mxu0 0.0
    %284 = vmatpush1.msra.mxu0 0.0
    %285 = vmatprep.subr.mxu0 0.0
    %286 = vmatpush1.msra.mxu0 0.0
    %287 = vmatprep.subr.mxu0 0.0
    %288 = vmatpush1.msra.mxu0 0.0
    %289 = vmatprep.subr.mxu0 0.0
    %290 = vmatpush1.msra.mxu0 0.0
    %291 = vmatprep.subr.mxu0 0.0
    %292 = vmatpush1.msra.mxu0 0.0
    %293 = vmatprep.subr.mxu0 0.0
    %294 = vmatpush1.msra.mxu0 0.0
    %295 = vmatprep.subr.mxu0 0.0
    %296 = vmatpush1.msra.mxu0 0.0
    %297 = vmatprep.mubr.f32.mxu0 0.0
    %298 = vmatmul.mubr.f32.gmra.mrb[0].mxu0 %v40
    %v299 = vpop.f32.mrb[0].mxu0
    %v300 = vadd.f32 0.0, %v299
    %v301 = vpop.f32.mrb[0].mxu0
    %302 = vmatprep.mubr.f32.mxu0 0.0
    %303 = vmatmul.mubr.f32.gmra.mrb[0].mxu0 %v41
    %v304 = vpop.f32.mrb[0].mxu0
    %v305 = vadd.f32 0.0, %v304
    %v306 = vpop.f32.mrb[0].mxu0
    %307 = vmatprep.mubr.f32.mxu0 0.0
    %308 = vmatmul.mubr.f32.gmra.mrb[0].mxu0 %v42
    %v309 = vpop.f32.mrb[0].mxu0
    %v310 = vadd.f32 0.0, %v309
    %v311 = vpop.f32.mrb[0].mxu0
    %312 = vmatprep.mubr.f32.mxu0 0.0
    %313 = vmatmul.mubr.f32.gmra.mrb[0].mxu0 %v43
    %v314 = vpop.f32.mrb[0].mxu0
    %v315 = vadd.f32 0.0, %v314
    %v316 = vpop.f32.mrb[0].mxu0
    %317 = vmatprep.mubr.f32.mxu0 0.0
    %318 = vmatmul.mubr.f32.gmra.mrb[0].mxu0 %v44
    %v319 = vpop.f32.mrb[0].mxu0
    %v320 = vadd.f32 0.0, %v319
    %v321 = vpop.f32.mrb[0].mxu0
    %322 = vmatprep.mubr.f32.mxu0 0.0
    %323 = vmatmul.mubr.f32.gmra.mrb[0].mxu0 %v45
    %v324 = vpop.f32.mrb[0].mxu0
    %v325 = vadd.f32 0.0, %v324
    %v326 = vpop.f32.mrb[0].mxu0
    %327 = vmatprep.mubr.f32.mxu0 0.0
    %328 = vmatmul.mubr.f32.gmra.mrb[0].mxu0 %v46
    %v329 = vpop.f32.mrb[0].mxu0
    %v330 = vadd.f32 0.0, %v329
    %v331 = vpop.f32.mrb[0].mxu0
    %332 = vmatprep.mubr.f32.mxu0 0.0
    %333 = vmatmul.mubr.f32.gmra.mrb[0].mxu0 %v47
    %v334 = vpop.f32.mrb[0].mxu0
    %v335 = vadd.f32 0.0, %v334
    %v336 = vpop.f32.mrb[0].mxu0
    %337 = vmatprep.mubr.f32.mxu0 0.0
    %338 = vmatmul.mubr.f32.gmra.mrb[0].mxu0 %v48
    %v339 = vpop.f32.mrb[0].mxu0
    %v340 = vadd.f32 0.0, %v339
    %v341 = vpop.f32.mrb[0].mxu0
    %342 = vmatprep.mubr.f32.mxu0 0.0
    %343 = vmatmul.mubr.f32.gmra.mrb[0].mxu0 %v49
    %v344 = vpop.f32.mrb[0].mxu0
    %v345 = vadd.f32 0.0, %v344
    %v346 = vpop.f32.mrb[0].mxu0
    %347 = vmatprep.mubr.f32.mxu0 0.0
    %348 = vmatmul.mubr.f32.gmra.mrb[0].mxu0 %v50
    %v349 = vpop.f32.mrb[0].mxu0
    %v350 = vadd.f32 0.0, %v349
    %v351 = vpop.f32.mrb[0].mxu0
    %352 = vmatprep.mubr.f32.mxu0 0.0
    %353 = vmatmul.mubr.f32.gmra.mrb[0].mxu0 %v51
    %v354 = vpop.f32.mrb[0].mxu0
    %v355 = vadd.f32 0.0, %v354
    %v356 = vpop.f32.mrb[0].mxu0
    %357 = vmatprep.mubr.f32.mxu0 0.0
    %358 = vmatmul.mubr.f32.gmra.mrb[0].mxu0 %v52
    %v359 = vpop.f32.mrb[0].mxu0
    %v360 = vadd.f32 0.0, %v359
    %v361 = vpop.f32.mrb[0].mxu0
    %362 = vmatprep.mubr.f32.mxu0 0.0
    %363 = vmatmul.mubr.f32.gmra.mrb[0].mxu0 %v53
    %v364 = vpop.f32.mrb[0].mxu0
    %v365 = vadd.f32 0.0, %v364
    %v366 = vpop.f32.mrb[0].mxu0
    %367 = vmatprep.mubr.f32.mxu0 0.0
    %368 = vmatmul.mubr.f32.gmra.mrb[0].mxu0 %v54
    %v369 = vpop.f32.mrb[0].mxu0
    %v370 = vadd.f32 0.0, %v369
    %v371 = vpop.f32.mrb[0].mxu0
    %372 = vmatprep.mubr.f32.mxu0 0.0
    %373 = vmatmul.mubr.f32.gmra.mrb[0].mxu0 %v55
    %v374 = vpop.f32.mrb[0].mxu0
    %v375 = vadd.f32 0.0, %v374
    %v376 = vpop.f32.mrb[0].mxu0
    %377 = vdwg.mxu0
    %v378 = vadd.f32 %v217, %v300
    %v379 = vadd.f32 %v218, %v305
    %v380 = vadd.f32 %v219, %v310
    %v381 = vadd.f32 %v220, %v315
    %v382 = vadd.f32 %v221, %v320
    %v383 = vadd.f32 %v222, %v325
    %v384 = vadd.f32 %v223, %v330
    %v385 = vadd.f32 %v224, %v335
    %v386 = vadd.f32 %v225, %v340
    %v387 = vadd.f32 %v226, %v345
    %v388 = vadd.f32 %v227, %v350
    %v389 = vadd.f32 %v228, %v355
    %v390 = vadd.f32 %v229, %v360
    %v391 = vadd.f32 %v230, %v365
    %v392 = vadd.f32 %v231, %v370
    %v393 = vadd.f32 %v232, %v375
    %394 = vmatprep.subr.mxu0 0.0
    %395 = vmatpush1.msra.mxu0 %v300
    %396 = vmatprep.subr.mxu0 0.0
    %397 = vmatpush1.msra.mxu0 %v305
    %398 = vmatprep.subr.mxu0 0.0
    %399 = vmatpush1.msra.mxu0 %v310
    %400 = vmatprep.subr.mxu0 0.0
    %401 = vmatpush1.msra.mxu0 %v315
    %402 = vmatprep.subr.mxu0 0.0
    %403 = vmatpush1.msra.mxu0 %v320
    %404 = vmatprep.subr.mxu0 0.0
    %405 = vmatpush1.msra.mxu0 %v325
    %406 = vmatprep.subr.mxu0 0.0
    %407 = vmatpush1.msra.mxu0 %v330
    %408 = vmatprep.subr.mxu0 0.0
    %409 = vmatpush1.msra.mxu0 %v335
    %410 = vmatprep.subr.mxu0 0.0
    %411 = vmatpush1.msra.mxu0 %v340
    %412 = vmatprep.subr.mxu0 0.0
    %413 = vmatpush1.msra.mxu0 %v345
    %414 = vmatprep.subr.mxu0 0.0
    %415 = vmatpush1.msra.mxu0 %v350
    %416 = vmatprep.subr.mxu0 0.0
    %417 = vmatpush1.msra.mxu0 %v355
    %418 = vmatprep.subr.mxu0 0.0
    %419 = vmatpush1.msra.mxu0 %v360
    %420 = vmatprep.subr.mxu0 0.0
    %421 = vmatpush1.msra.mxu0 %v365
    %422 = vmatprep.subr.mxu0 0.0
    %423 = vmatpush1.msra.mxu0 %v370
    %424 = vmatprep.subr.mxu0 0.0
    %425 = vmatpush1.msra.mxu0 %v375
    %426 = vmatprep.subr.mxu0 0.0
    %427 = vmatpush1.msra.mxu0 0.0
    %428 = vmatprep.subr.mxu0 0.0
    %429 = vmatpush1.msra.mxu0 0.0
    %430 = vmatprep.subr.mxu0 0.0
    %431 = vmatpush1.msra.mxu0 0.0
    %432 = vmatprep.subr.mxu0 0.0
    %433 = vmatpush1.msra.mxu0 0.0
    %434 = vmatprep.subr.mxu0 0.0
    %435 = vmatpush1.msra.mxu0 0.0
    %436 = vmatprep.subr.mxu0 0.0
    %437 = vmatpush1.msra.mxu0 0.0
    %438 = vmatprep.subr.mxu0 0.0
    %439 = vmatpush1.msra.mxu0 0.0
    %440 = vmatprep.subr.mxu0 0.0
    %441 = vmatpush1.msra.mxu0 0.0
    %442 = vmatprep.subr.mxu0 0.0
    %443 = vmatpush1.msra.mxu0 0.0
    %444 = vmatprep.subr.mxu0 0.0
    %445 = vmatpush1.msra.mxu0 0.0
    %446 = vmatprep.subr.mxu0 0.0
    %447 = vmatpush1.msra.mxu0 0.0
    %448 = vmatprep.subr.mxu0 0.0
    %449 = vmatpush1.msra.mxu0 0.0
    %450 = vmatprep.subr.mxu0 0.0
    %451 = vmatpush1.msra.mxu0 0.0
    %452 = vmatprep.subr.mxu0 0.0
    %453 = vmatpush1.msra.mxu0 0.0
    %454 = vmatprep.subr.mxu0 0.0
    %455 = vmatpush1.msra.mxu0 0.0
    %456 = vmatprep.subr.mxu0 0.0
    %457 = vmatpush1.msra.mxu0 0.0
    %458 = vmatprep.mubr.f32.mxu0 0.0
    %459 = vmatmul.mubr.f32.gmra.mrb[0].mxu0 %v40
    %v460 = vpop.f32.mrb[0].mxu0
    %v461 = vadd.f32 0.0, %v460
    %v462 = vpop.f32.mrb[0].mxu0
    %463 = vmatprep.mubr.f32.mxu0 0.0
    %464 = vmatmul.mubr.f32.gmra.mrb[0].mxu0 %v41
    %v465 = vpop.f32.mrb[0].mxu0
    %v466 = vadd.f32 0.0, %v465
    %v467 = vpop.f32.mrb[0].mxu0
    %468 = vmatprep.mubr.f32.mxu0 0.0
    %469 = vmatmul.mubr.f32.gmra.mrb[0].mxu0 %v42
    %v470 = vpop.f32.mrb[0].mxu0
    %v471 = vadd.f32 0.0, %v470
    %v472 = vpop.f32.mrb[0].mxu0
    %473 = vmatprep.mubr.f32.mxu0 0.0
    %474 = vmatmul.mubr.f32.gmra.mrb[0].mxu0 %v43
    %v475 = vpop.f32.mrb[0].mxu0
    %v476 = vadd.f32 0.0, %v475
    %v477 = vpop.f32.mrb[0].mxu0
    %478 = vmatprep.mubr.f32.mxu0 0.0
    %479 = vmatmul.mubr.f32.gmra.mrb[0].mxu0 %v44
    %v480 = vpop.f32.mrb[0].mxu0
    %v481 = vadd.f32 0.0, %v480
    %v482 = vpop.f32.mrb[0].mxu0
    %483 = vmatprep.mubr.f32.mxu0 0.0
    %484 = vmatmul.mubr.f32.gmra.mrb[0].mxu0 %v45
    %v485 = vpop.f32.mrb[0].mxu0
    %v486 = vadd.f32 0.0, %v485
    %v487 = vpop.f32.mrb[0].mxu0
    %488 = vmatprep.mubr.f32.mxu0 0.0
    %489 = vmatmul.mubr.f32.gmra.mrb[0].mxu0 %v46
    %v490 = vpop.f32.mrb[0].mxu0
    %v491 = vadd.f32 0.0, %v490
    %v492 = vpop.f32.mrb[0].mxu0
    %493 = vmatprep.mubr.f32.mxu0 0.0
    %494 = vmatmul.mubr.f32.gmra.mrb[0].mxu0 %v47
    %v495 = vpop.f32.mrb[0].mxu0
    %v496 = vadd.f32 0.0, %v495
    %v497 = vpop.f32.mrb[0].mxu0
    %498 = vmatprep.mubr.f32.mxu0 0.0
    %499 = vmatmul.mubr.f32.gmra.mrb[0].mxu0 %v48
    %v500 = vpop.f32.mrb[0].mxu0
    %v501 = vadd.f32 0.0, %v500
    %v502 = vpop.f32.mrb[0].mxu0
    %503 = vmatprep.mubr.f32.mxu0 0.0
    %504 = vmatmul.mubr.f32.gmra.mrb[0].mxu0 %v49
    %v505 = vpop.f32.mrb[0].mxu0
    %v506 = vadd.f32 0.0, %v505
    %v507 = vpop.f32.mrb[0].mxu0
    %508 = vmatprep.mubr.f32.mxu0 0.0
    %509 = vmatmul.mubr.f32.gmra.mrb[0].mxu0 %v50
    %v510 = vpop.f32.mrb[0].mxu0
    %v511 = vadd.f32 0.0, %v510
    %v512 = vpop.f32.mrb[0].mxu0
    %513 = vmatprep.mubr.f32.mxu0 0.0
    %514 = vmatmul.mubr.f32.gmra.mrb[0].mxu0 %v51
    %v515 = vpop.f32.mrb[0].mxu0
    %v516 = vadd.f32 0.0, %v515
    %v517 = vpop.f32.mrb[0].mxu0
    %518 = vmatprep.mubr.f32.mxu0 0.0
    %519 = vmatmul.mubr.f32.gmra.mrb[0].mxu0 %v52
    %v520 = vpop.f32.mrb[0].mxu0
    %v521 = vadd.f32 0.0, %v520
    %v522 = vpop.f32.mrb[0].mxu0
    %523 = vmatprep.mubr.f32.mxu0 0.0
    %524 = vmatmul.mubr.f32.gmra.mrb[0].mxu0 %v53
    %v525 = vpop.f32.mrb[0].mxu0
    %v526 = vadd.f32 0.0, %v525
    %v527 = vpop.f32.mrb[0].mxu0
    %528 = vmatprep.mubr.f32.mxu0 0.0
    %529 = vmatmul.mubr.f32.gmra.mrb[0].mxu0 %v54
    %v530 = vpop.f32.mrb[0].mxu0
    %v531 = vadd.f32 0.0, %v530
    %v532 = vpop.f32.mrb[0].mxu0
    %533 = vmatprep.mubr.f32.mxu0 0.0
    %534 = vmatmul.mubr.f32.gmra.mrb[0].mxu0 %v55
    %v535 = vpop.f32.mrb[0].mxu0
    %v536 = vadd.f32 0.0, %v535
    %v537 = vpop.f32.mrb[0].mxu0
    %538 = vdwg.mxu0
    %v539 = vadd.f32 %v378, %v461
    %v540 = vadd.f32 %v379, %v466
    %v541 = vadd.f32 %v380, %v471
    %v542 = vadd.f32 %v381, %v476
    %v543 = vadd.f32 %v382, %v481
    %v544 = vadd.f32 %v383, %v486
    %v545 = vadd.f32 %v384, %v491
    %v546 = vadd.f32 %v385, %v496
    %v547 = vadd.f32 %v386, %v501
    %v548 = vadd.f32 %v387, %v506
    %v549 = vadd.f32 %v388, %v511
    %v550 = vadd.f32 %v389, %v516
    %v551 = vadd.f32 %v390, %v521
    %v552 = vadd.f32 %v391, %v526
    %v553 = vadd.f32 %v392, %v531
    %v554 = vadd.f32 %v393, %v536
    %v555 = vmul.f32 %v539, 0.25
    %v556 = vmul.f32 %v540, 0.25
    %v557 = vmul.f32 %v541, 0.25
    %v558 = vmul.f32 %v542, 0.25
    %v559 = vmul.f32 %v543, 0.25
    %v560 = vmul.f32 %v544, 0.25
    %v561 = vmul.f32 %v545, 0.25
    %v562 = vmul.f32 %v546, 0.25
    %v563 = vmul.f32 %v547, 0.25
    %v564 = vmul.f32 %v548, 0.25
    %v565 = vmul.f32 %v549, 0.25
    %v566 = vmul.f32 %v550, 0.25
    %v567 = vmul.f32 %v551, 0.25
    %v568 = vmul.f32 %v552, 0.25
    %v569 = vmul.f32 %v553, 0.25
    %v570 = vmul.f32 %v554, 0.25
    %571 = vst [vmem:[#allocation7] sm:$0xff] %v555
    %572 = vst [vmem:[#allocation7 + $0x8] sm:$0xff] %v556
    %573 = vst [vmem:[#allocation7 + $0x10] sm:$0xff] %v557
    %574 = vst [vmem:[#allocation7 + $0x18] sm:$0xff] %v558
    %575 = vst [vmem:[#allocation7 + $0x20] sm:$0xff] %v559
    %576 = vst [vmem:[#allocation7 + $0x28] sm:$0xff] %v560
    %577 = vst [vmem:[#allocation7 + $0x30] sm:$0xff] %v561
    %578 = vst [vmem:[#allocation7 + $0x38] sm:$0xff] %v562
    %579 = vst [vmem:[#allocation7 + $0x40] sm:$0xff] %v563
    %580 = vst [vmem:[#allocation7 + $0x48] sm:$0xff] %v564
    %581 = vst [vmem:[#allocation7 + $0x50] sm:$0xff] %v565
    %582 = vst [vmem:[#allocation7 + $0x58] sm:$0xff] %v566
    %583 = vst [vmem:[#allocation7 + $0x60] sm:$0xff] %v567
    %584 = vst [vmem:[#allocation7 + $0x68] sm:$0xff] %v568
    %585 = vst [vmem:[#allocation7 + $0x70] sm:$0xff] %v569
    %586 = vst [vmem:[#allocation7 + $0x78] sm:$0xff] %v570
    // Predicated region
    $region18: #{tpu_custom_call.1} parent=1 // pred_check
      _
    $region19: #{tpu_custom_call.1} parent=1 // pred_check_branch
      %588 = sbr.rel (0) target = $region21
    $region20: #{tpu_custom_call.1} parent=1 // pred_region
      %s590 = ssub.s32 2048, 2048
      %591 = vsyncadd [#allocation4], %s590
      %s592 = sshll.u32 [#allocation7], 4
      %s593 = int_to_ptr.vmem [resolvable:$true] %s592
      %598 = dma.vmem_to_hbm [thread:$0]  %s593, 2048, %s2, [#allocation4], 128, 128, 8
    $region21: #{tpu_custom_call.1} parent=1 // pred_fallthru
      _
    // Predicated region
    $region22: #{tpu_custom_call.1} parent=1 // pred_check
      _
    $region23: #{tpu_custom_call.1} parent=1 // pred_check_branch
      %600 = sbr.rel (0) target = $region25
    $region24: #{tpu_custom_call.1} parent=1 // pred_region
      %601 = dma.done [#allocation4], 2048
    $region25: #{tpu_custom_call.1} parent=1 // pred_fallthru
      _
    %602 = vsyncpa [#allocation3], 1
    %603 = vsyncpa [#allocation6], 1
    %604 = vsyncpa [#allocation4], 1

</llo_original>
